<compile_context>
chip_gen: v7x
topology: tpu7x:2x2x1
jax: 0.10.0
libtpu: 0.0.40
codegen_flags: <defaults>
</compile_context>

<pallas_src>
import functools

import jax
import jax.numpy as jnp
from jax import lax
from jax.experimental import pallas as pl
from jax.experimental.pallas import tpu as pltpu


# ------------------------------ Fused CBAM kernel ----------------------------- #
def cbam_kernel(x_ref, w1_ref, b1_ref, w2_ref, b2_ref, t_ref, bsp_ref, o_ref,
                *, inv_hw, inv_c):
    x = x_ref[...]                                        # (Bblk, C, HW)
    bblk = x.shape[0]

    # ---------------- Channel attention ----------------
    # Pooled stats over the (lane-dense) spatial axis, stacked: (2*Bblk, C).
    avg = jnp.sum(x, axis=-1) * inv_hw                    # (Bblk, C)
    mx = jnp.max(x, axis=-1)                              # (Bblk, C)
    stats = jnp.concatenate([avg, mx], axis=0)            # (2*Bblk, C)

    # Shared MLP on both pooled vectors at once (two matmuls total).
    h = jnp.dot(stats, w1_ref[...], preferred_element_type=jnp.float32) + b1_ref[...]
    h = jnp.maximum(h, 0.0)                               # ReLU
    y = jnp.dot(h, w2_ref[...], preferred_element_type=jnp.float32) + b2_ref[...]

    att_c = jax.nn.sigmoid(y[:bblk] + y[bblk:])           # (Bblk, C)
    x2 = x * att_c[:, :, None]                            # rescale, broadcast over HW

    # ---------------- Spatial attention ----------------
    f_max = jnp.max(x2, axis=1)                           # (Bblk, HW)
    f_avg = jnp.sum(x2, axis=1) * inv_c                   # (Bblk, HW)
    feat = jnp.concatenate([f_max, f_avg], axis=-1)       # (Bblk, 2*HW), torch order

    # 7x7 zero-padded conv as one banded-Toeplitz matmul on the MXU.
    conv = jnp.dot(feat, t_ref[...], preferred_element_type=jnp.float32)
    conv = conv + bsp_ref[0]                              # conv bias (BN folded)

    att_s = jax.nn.sigmoid(conv)                          # (Bblk, HW)
    o_ref[...] = x2 * att_s[:, None, :]                   # broadcast over C


# ------------------------- Toeplitz conv-matrix builder ----------------------- #
def _build_conv_toeplitz(wsp, H, W):
    """Build T (2*H*W, H*W) so that feat(1, 2*HW) @ T == conv2d(feat, wsp, pad=P)."""
    K = wsp.shape[-1]
    P = (K - 1) // 2
    HW = H * W
    idx = jnp.arange(HW, dtype=jnp.int32)
    yy = idx // W
    xx = idx % W
    # rows = input position q, cols = output position p
    dym = yy[:, None] - yy[None, :]                       # (HW, HW) = qy - py
    dxm = xx[:, None] - xx[None, :]                       # (HW, HW) = qx - px
    valid = (jnp.abs(dym) <= P) & (jnp.abs(dxm) <= P)
    wy = jnp.clip(dym + P, 0, K - 1)
    wx = jnp.clip(dxm + P, 0, K - 1)
    taps = wsp[:, wy, wx]                                 # (2, HW, HW)
    T = jnp.where(valid[None], taps, 0.0)
    return T.reshape(2 * HW, HW).astype(jnp.float32)      # rows: [max-channel; avg-channel]


def _pick_bblk(B, img_bytes, target_bytes=1 << 20, min_blocks=2):
    """Largest divisor of B whose block is <= target bytes, preferring >= min_blocks steps."""
    max_imgs = max(1, target_bytes // max(img_bytes, 1))
    divisors = [d for d in range(1, B + 1) if B % d == 0]
    cands = [d for d in divisors if d <= max_imgs and B // d >= min_blocks]
    if not cands:
        cands = [d for d in divisors if d <= max_imgs] or [1]
    return max(cands)


# ----------------------------------- Wrapper ----------------------------------- #
def cbam_pallas(x, params, *, bn_eps=1e-5):
    B, C, H, W = x.shape
    HW = H * W
    x = x.astype(jnp.float32).reshape(B, C, HW)           # lane-dense spatial layout

    # Channel-attention MLP params, transposed for (rows=stats, cols=features) matmuls.
    w1, b1, w2, b2 = params["w1"], params["b1"], params["w2"], params["b2"]
    mid = w1.shape[0]
    midp = ((mid + 7) // 8) * 8                           # pad hidden dim for layout
    w1t = jnp.zeros((C, midp), jnp.float32).at[:, :mid].set(w1.T)
    b1r = jnp.zeros((1, midp), jnp.float32).at[0, :mid].set(b1)
    w2t = jnp.zeros((midp, C), jnp.float32).at[:mid, :].set(w2.T)
    b2r = b2.reshape(1, C).astype(jnp.float32)

    # Fold eval-mode BatchNorm (mean=0, var=1, gamma=1, beta=0) into conv weight/bias.
    bn_scale = 1.0 / jnp.sqrt(1.0 + bn_eps)
    wsp = params["wsp"][0].astype(jnp.float32) * bn_scale  # (2, K, K); ch0=max, ch1=avg
    bsp = (params["bsp"] * bn_scale).astype(jnp.float32)   # (1,)
    t_full = _build_conv_toeplitz(wsp, H, W)               # (2*HW, HW)

    bblk = _pick_bblk(B, C * HW * 4)
    grid = (B // bblk,)

    kernel = functools.partial(cbam_kernel, inv_hw=float(1.0 / HW), inv_c=float(1.0 / C))
    out = pl.pallas_call(
        kernel,
        out_shape=jax.ShapeDtypeStruct((B, C, HW), jnp.float32),
        grid=grid,
        in_specs=[
            pl.BlockSpec((bblk, C, HW), lambda b: (b, 0, 0)),
            pl.BlockSpec((C, midp), lambda b: (0, 0)),
            pl.BlockSpec((1, midp), lambda b: (0, 0)),
            pl.BlockSpec((midp, C), lambda b: (0, 0)),
            pl.BlockSpec((1, C), lambda b: (0, 0)),
            pl.BlockSpec((2 * HW, HW), lambda b: (0, 0)),
            pl.BlockSpec(memory_space=pltpu.MemorySpace.SMEM),
        ],
        out_specs=pl.BlockSpec((bblk, C, HW), lambda b: (b, 0, 0)),
        compiler_params=pltpu.CompilerParams(dimension_semantics=("parallel",)),
    )(x, w1t, b1r, w2t, b2r, t_full, bsp)

    return out.reshape(B, C, H, W)


# ------------------------------ Pure-JAX reference --------------------------- #
def cbam_ref(x, params, bn_eps=1e-5):
    w1, b1, w2, b2 = params["w1"], params["b1"], params["w2"], params["b2"]
    avg = jnp.mean(x, axis=(2, 3))
    mx = jnp.max(x, axis=(2, 3))

    def mlp(p):
        h = jax.nn.relu(p @ w1.T + b1)
        return h @ w2.T + b2

    att_c = jax.nn.sigmoid(mlp(avg) + mlp(mx))[:, :, None, None]
    x2 = x * att_c

    fmax = jnp.max(x2, axis=1, keepdims=True)
    favg = jnp.mean(x2, axis=1, keepdims=True)
    feat = jnp.concatenate([fmax, favg], axis=1)          # (B, 2, H, W)
    P = (params["wsp"].shape[-1] - 1) // 2
    y = lax.conv_general_dilated(
        feat, params["wsp"], (1, 1), [(P, P), (P, P)],
        dimension_numbers=("NCHW", "OIHW", "NCHW"))
    y = y + params["bsp"][None, :, None, None]
    y = y / jnp.sqrt(1.0 + bn_eps)                        # eval-mode BN, default stats
    att_s = jax.nn.sigmoid(y)
    return x2 * att_s


# ------------------------------- Param init ----------------------------------- #
def init_params(key, C, reduction=16, ksize=7):
    mid = max(C // reduction, 1)
    k1, k2, k3, k4, k5, k6 = jax.random.split(key, 6)
    return dict(
        w1=jax.random.normal(k1, (mid, C), jnp.float32) * 0.2,
        b1=jax.random.normal(k2, (mid,), jnp.float32) * 0.1,
        w2=jax.random.normal(k3, (C, mid), jnp.float32) * 0.2,
        b2=jax.random.normal(k4, (C,), jnp.float32) * 0.1,
        wsp=jax.random.normal(k5, (1, 2, ksize, ksize), jnp.float32) * 0.1,
        bsp=jax.random.normal(k6, (1,), jnp.float32) * 0.1,
    )


if __name__ == "__main__":
    key = jax.random.PRNGKey(0)
    kx, kp = jax.random.split(key)
    # in_channels=32 so that in_channels // reduction(=16) >= 1, matching the module.
    B, C, H, W = 2, 32, 16, 16
    x = jax.random.normal(kx, (B, C, H, W), jnp.float32)
    params = init_params(kp, C, reduction=16, ksize=7)

    out = cbam_pallas(x, params)
    out = jax.block_until_ready(out)

    ref = cbam_ref(x, params)
    err = float(jnp.max(jnp.abs(out - ref)))
    assert out.shape == (B, C, H, W)
    assert err < 1e-3, f"max abs err {err}"
    print("KERNEL_OK")
</pallas_src>

<mosaic_0001>
module attributes {stable_mosaic.version = 11 : i64} {
  func.func @cbam_kernel(%arg0: i32, %arg1: memref<1x32x256xf32, #tpu.memory_space<vmem>>, %arg2: memref<32x8xf32, #tpu.memory_space<vmem>>, %arg3: memref<1x8xf32, #tpu.memory_space<vmem>>, %arg4: memref<8x32xf32, #tpu.memory_space<vmem>>, %arg5: memref<1x32xf32, #tpu.memory_space<vmem>>, %arg6: memref<512x256xf32, #tpu.memory_space<vmem>>, %arg7: memref<1xf32, #tpu.memory_space<smem>>, %arg8: memref<1x32x256xf32, #tpu.memory_space<vmem>>) attributes {dimension_semantics = [#tpu.dimension_semantics<parallel>], iteration_bounds = array<i64: 2>, scalar_prefetch = 0 : i64, scratch_operands = 0 : i64, tpu.core_type = #tpu.core_type<tc>, window_params = [{transform_indices = @transform_0, window_bounds = array<i64: 1, 32, 256>}, {pipeline_mode = #tpu.pipeline_mode<synchronous>, transform_indices = @transform_1, window_bounds = array<i64: 32, 8>}, {pipeline_mode = #tpu.pipeline_mode<synchronous>, transform_indices = @transform_2, window_bounds = array<i64: 1, 8>}, {pipeline_mode = #tpu.pipeline_mode<synchronous>, transform_indices = @transform_3, window_bounds = array<i64: 8, 32>}, {pipeline_mode = #tpu.pipeline_mode<synchronous>, transform_indices = @transform_4, window_bounds = array<i64: 1, 32>}, {pipeline_mode = #tpu.pipeline_mode<synchronous>, transform_indices = @transform_5, window_bounds = array<i64: 512, 256>}, {transform_indices = @transform_6, window_bounds = array<i64: 1>}, {transform_indices = @transform_7, window_bounds = array<i64: 1, 32, 256>}]} {
    %c0 = arith.constant 0 : index
    %c0_0 = arith.constant 0 : index
    %c0_1 = arith.constant 0 : index
    %0 = vector.load %arg1[%c0, %c0_0, %c0_1] : memref<1x32x256xf32, #tpu.memory_space<vmem>>, vector<1x32x256xf32>
    %cst = arith.constant dense<0.000000e+00> : vector<1x32xf32>
    %1 = vector.multi_reduction <add>, %0, %cst [2] : vector<1x32x256xf32> to vector<1x32xf32>
    %cst_2 = arith.constant 3.906250e-03 : f32
    %2 = vector.broadcast %cst_2 : f32 to vector<1x32xf32>
    %3 = arith.mulf %1, %2 : vector<1x32xf32>
    %cst_3 = arith.constant dense<0xFF800000> : vector<1x32xf32>
    %4 = vector.multi_reduction <maximumf>, %0, %cst_3 [2] : vector<1x32x256xf32> to vector<1x32xf32>
    %5 = tpu.concatenate %3, %4 in 0 : vector<1x32xf32>, vector<1x32xf32> -> vector<2x32xf32>
    %c0_4 = arith.constant 0 : index
    %c0_5 = arith.constant 0 : index
    %6 = vector.load %arg2[%c0_4, %c0_5] : memref<32x8xf32, #tpu.memory_space<vmem>>, vector<32x8xf32>
    %cst_6 = arith.constant dense<0.000000e+00> : vector<2x8xf32>
    %7 = tpu.matmul %5, %6, %cst_6 {dimension_numbers = #tpu.dot_dimension_numbers<[1], [0], [0], [1], [0, 0, 1, 1], [], []>} : vector<2x32xf32>, vector<32x8xf32>, vector<2x8xf32> -> vector<2x8xf32>
    %c0_7 = arith.constant 0 : index
    %c0_8 = arith.constant 0 : index
    %8 = vector.load %arg3[%c0_7, %c0_8] : memref<1x8xf32, #tpu.memory_space<vmem>>, vector<1x8xf32>
    %9 = vector.broadcast %8 : vector<1x8xf32> to vector<2x8xf32>
    %10 = arith.addf %7, %9 : vector<2x8xf32>
    %cst_9 = arith.constant 0.000000e+00 : f32
    %11 = vector.broadcast %cst_9 : f32 to vector<2x8xf32>
    %12 = arith.maximumf %10, %11 : vector<2x8xf32>
    %c0_10 = arith.constant 0 : index
    %c0_11 = arith.constant 0 : index
    %13 = vector.load %arg4[%c0_10, %c0_11] : memref<8x32xf32, #tpu.memory_space<vmem>>, vector<8x32xf32>
    %cst_12 = arith.constant dense<0.000000e+00> : vector<2x32xf32>
    %14 = tpu.matmul %12, %13, %cst_12 {dimension_numbers = #tpu.dot_dimension_numbers<[1], [0], [0], [1], [0, 0, 1, 1], [], []>} : vector<2x8xf32>, vector<8x32xf32>, vector<2x32xf32> -> vector<2x32xf32>
    %c0_13 = arith.constant 0 : index
    %c0_14 = arith.constant 0 : index
    %15 = vector.load %arg5[%c0_13, %c0_14] : memref<1x32xf32, #tpu.memory_space<vmem>>, vector<1x32xf32>
    %16 = vector.broadcast %15 : vector<1x32xf32> to vector<2x32xf32>
    %17 = arith.addf %14, %16 : vector<2x32xf32>
    %18 = vector.extract_strided_slice %17 {offsets = [0, 0], sizes = [1, 32], strides = [1, 1]} : vector<2x32xf32> to vector<1x32xf32>
    %19 = vector.extract_strided_slice %17 {offsets = [1, 0], sizes = [1, 32], strides = [1, 1]} : vector<2x32xf32> to vector<1x32xf32>
    %20 = arith.addf %18, %19 : vector<1x32xf32>
    %21 = arith.negf %20 : vector<1x32xf32>
    %22 = math.exp %21 : vector<1x32xf32>
    %cst_15 = arith.constant 1.000000e+00 : f32
    %23 = vector.broadcast %cst_15 : f32 to vector<1x32xf32>
    %24 = arith.addf %23, %22 : vector<1x32xf32>
    %25 = arith.divf %23, %24 : vector<1x32xf32>
    %26 = vector.shape_cast %25 : vector<1x32xf32> to vector<1x32x1xf32>
    %27 = vector.broadcast %26 : vector<1x32x1xf32> to vector<1x32x256xf32>
    %28 = arith.mulf %0, %27 : vector<1x32x256xf32>
    %cst_16 = arith.constant dense<0xFF800000> : vector<1x256xf32>
    %29 = vector.multi_reduction <maximumf>, %28, %cst_16 [1] : vector<1x32x256xf32> to vector<1x256xf32>
    %cst_17 = arith.constant dense<0.000000e+00> : vector<1x256xf32>
    %30 = vector.multi_reduction <add>, %28, %cst_17 [1] : vector<1x32x256xf32> to vector<1x256xf32>
    %cst_18 = arith.constant 3.125000e-02 : f32
    %31 = vector.broadcast %cst_18 : f32 to vector<1x256xf32>
    %32 = arith.mulf %30, %31 : vector<1x256xf32>
    %33 = tpu.concatenate %29, %32 in 1 : vector<1x256xf32>, vector<1x256xf32> -> vector<1x512xf32>
    %c0_19 = arith.constant 0 : index
    %c0_20 = arith.constant 0 : index
    %34 = vector.load %arg6[%c0_19, %c0_20] : memref<512x256xf32, #tpu.memory_space<vmem>>, vector<512x256xf32>
    %cst_21 = arith.constant dense<0.000000e+00> : vector<1x256xf32>
    %35 = tpu.matmul %33, %34, %cst_21 {dimension_numbers = #tpu.dot_dimension_numbers<[1], [0], [0], [1], [0, 0, 1, 1], [], []>} : vector<1x512xf32>, vector<512x256xf32>, vector<1x256xf32> -> vector<1x256xf32>
    %c0_22 = arith.constant 0 : index
    %36 = memref.load %arg7[%c0_22] : memref<1xf32, #tpu.memory_space<smem>>
    %37 = vector.broadcast %36 : f32 to vector<1x256xf32>
    %38 = arith.addf %35, %37 : vector<1x256xf32>
    %39 = arith.negf %38 : vector<1x256xf32>
    %40 = math.exp %39 : vector<1x256xf32>
    %cst_23 = arith.constant 1.000000e+00 : f32
    %41 = vector.broadcast %cst_23 : f32 to vector<1x256xf32>
    %42 = arith.addf %41, %40 : vector<1x256xf32>
    %43 = arith.divf %41, %42 : vector<1x256xf32>
    %44 = vector.shape_cast %43 : vector<1x256xf32> to vector<1x1x256xf32>
    %45 = vector.broadcast %44 : vector<1x1x256xf32> to vector<1x32x256xf32>
    %46 = arith.mulf %28, %45 : vector<1x32x256xf32>
    %c0_24 = arith.constant 0 : index
    %c0_25 = arith.constant 0 : index
    %c0_26 = arith.constant 0 : index
    %47 = vector.load %arg8[%c0_24, %c0_25, %c0_26] : memref<1x32x256xf32, #tpu.memory_space<vmem>>, vector<1x32x256xf32>
    tpu.vector_store %arg8[%c0_24, %c0_25, %c0_26], %46 {strides = array<i32>} : memref<1x32x256xf32, #tpu.memory_space<vmem>>, vector<1x32x256xf32>,
    return
  }
  func.func @transform_0(%arg0: i32) -> (i32, i32, i32) {
    %c0_i32 = arith.constant 0 : i32
    %c0_i32_0 = arith.constant 0 : i32
    %c0_i32_1 = arith.constant 0 : i32
    return %arg0, %c0_i32, %c0_i32_0 : i32, i32, i32
  }
  func.func @transform_1(%arg0: i32) -> (i32, i32) {
    %c0_i32 = arith.constant 0 : i32
    %c0_i32_0 = arith.constant 0 : i32
    %c0_i32_1 = arith.constant 0 : i32
    return %c0_i32, %c0_i32_0 : i32, i32
  }
  func.func @transform_2(%arg0: i32) -> (i32, i32) {
    %c0_i32 = arith.constant 0 : i32
    %c0_i32_0 = arith.constant 0 : i32
    %c0_i32_1 = arith.constant 0 : i32
    return %c0_i32, %c0_i32_0 : i32, i32
  }
  func.func @transform_3(%arg0: i32) -> (i32, i32) {
    %c0_i32 = arith.constant 0 : i32
    %c0_i32_0 = arith.constant 0 : i32
    %c0_i32_1 = arith.constant 0 : i32
    return %c0_i32, %c0_i32_0 : i32, i32
  }
  func.func @transform_4(%arg0: i32) -> (i32, i32) {
    %c0_i32 = arith.constant 0 : i32
    %c0_i32_0 = arith.constant 0 : i32
    %c0_i32_1 = arith.constant 0 : i32
    return %c0_i32, %c0_i32_0 : i32, i32
  }
  func.func @transform_5(%arg0: i32) -> (i32, i32) {
    %c0_i32 = arith.constant 0 : i32
    %c0_i32_0 = arith.constant 0 : i32
    %c0_i32_1 = arith.constant 0 : i32
    return %c0_i32, %c0_i32_0 : i32, i32
  }
  func.func @transform_6(%arg0: i32) -> i32 {
    %c0_i32 = arith.constant 0 : i32
    %c0_i32_0 = arith.constant 0 : i32
    return %c0_i32 : i32
  }
  func.func @transform_7(%arg0: i32) -> (i32, i32, i32) {
    %c0_i32 = arith.constant 0 : i32
    %c0_i32_0 = arith.constant 0 : i32
    %c0_i32_1 = arith.constant 0 : i32
    return %arg0, %c0_i32, %c0_i32_0 : i32, i32, i32
  }
}

</mosaic_0001>

<llo_original>
// kernel: tpu_custom_call.1
$region0: #{tpu_custom_call.1}
  #allocation0 [shape = 'u32[]', space=smem, size = 0x4, offset = 0x4, fixed_abs, tag = 'smem constant byte address 0x4 - core index']
  #allocation1 [shape = 'u32[144,128]{1,0:T(1,128)}', space=vmem, size = 0x12000, scoped, tag = 'internal scratch']
  #allocation2 [shape = 'f32[1]{0:T(128)S(6)}', space=smem, size = 0x200, scoped, tag = 'scoped memory for tpu_custom_call.1']
  %s0 = inlined_call_operand.hbm [shape: f32[2,32,256], index: 0, kind: input, shape index: {}]
  %s1 = inlined_call_operand.vmem [shape: f32[32,8], index: 1, kind: input, shape index: {}]
  %s2 = inlined_call_operand.vmem [shape: f32[1,8], index: 2, kind: input, shape index: {}]
  %s3 = inlined_call_operand.vmem [shape: f32[8,32], index: 3, kind: input, shape index: {}]
  %s4 = inlined_call_operand.vmem [shape: f32[1,32], index: 4, kind: input, shape index: {}]
  %s5 = inlined_call_operand.hbm [shape: f32[512,256], index: 5, kind: input, shape index: {}]
  %s6 = inlined_call_operand.<no memory space> [shape: f32[1], index: 6, kind: input, shape index: {}]
  %s7 = inlined_call_operand.hbm [shape: f32[2,32,256], index: 7, kind: output, shape index: {}]
  %s8 = sld [smem:[#allocation0]]
  $region69: #{tpu_custom_call.1} parent=0
    _
  %s10 = ssub.s32 1, %s8
  %s11 = scalar_select 0, %s10, %s8
  %12 = sst [smem:[#allocation2]] %s6
  $region1: #{tpu_custom_call.1} parent=0
    #allocation3 [shape = 'u8[65536]{0}', space=vmem, size = 0x10000, scoped, tag = 'input window, operand 0']
    #allocation4 [shape = 's32[2]{0}', space=sflag, size = 0x8, scoped, tag = 'scoped memory for tpu_custom_call.1']
    #allocation5 [shape = 's32[2]{0}', space=sflag, size = 0x8, scoped, tag = 'scoped memory for tpu_custom_call.1']
    #allocation6 [shape = 'u8[524288]{0}', space=vmem, size = 0x80000, scoped, tag = 'input window, operand 5, single buffered']
    #allocation7 [shape = 's32[1]{0}', space=sflag, size = 0x4, scoped, tag = 'scoped memory for tpu_custom_call.1']
    #allocation8 [shape = 'u8[65536]{0}', space=vmem, size = 0x10000, scoped, tag = 'output window, operand 0']
    %13 = vsyncpa [#allocation4], 0
    %s14 = scalar_lea.sflag [#allocation4], 1
    %15 = vsyncpa %s14, 0
    %16 = vsyncpa [#allocation7], 0
    %17 = vsyncpa [#allocation5], 0
    %s18 = scalar_lea.sflag [#allocation5], 1
    %19 = vsyncpa %s18, 0
    loop: start=0, step=1, limit=4
    $region2: #{tpu_custom_call.1} parent=1 // loop_pre_header
      _
    $region3: #{tpu_custom_call.1} parent=1 // loop_header
      %s21 = sphi 0, %s25
      %p22 = scmp.ge.s32.totalorder %s21, 4
      %s31 = sphi 0, %s33
      %s34 = sphi 0, %s31
      %s35 = sphi 0, %s34
      %s51 = sphi 0, %s35
      %s55 = sphi 0, %s55
      %s57 = sphi 0, %s55
      %s58 = sphi 0, %s57
      %s72 = sphi 0, %s58
      %s76 = sphi 0, %s76
      %s78 = sphi 0, %s76
      %s79 = sphi 0, %s78
      %s93 = sphi 0, %s79
      %s97 = sphi 0, %s97
      %s99 = sphi 0, %s97
      %s100 = sphi 0, %s99
      %s114 = sphi 0, %s100
      %s118 = sphi 0, %s118
      %s120 = sphi 0, %s118
      %s121 = sphi 0, %s120
      %s135 = sphi 0, %s121
      %s139 = sphi 0, %s139
      %s141 = sphi 0, %s139
      %s142 = sphi 0, %s141
      %s156 = sphi 0, %s142
      %s160 = sphi 0, %s160
      %s162 = sphi 0, %s160
      %s163 = sphi 0, %s162
      %s177 = sphi 0, %s163
      %s183 = sphi 0, %s185
      %s186 = sphi 0, %s183
      %s187 = sphi 0, %s186
      %s203 = sphi 0, %s187
    $region4: #{tpu_custom_call.1} parent=1 // loop_header_branch
      %24 = sbr.rel (%p22) target = $region8
    $region5: #{tpu_custom_call.1} parent=1 // loop_body
      %s26 = ssub.s32 %s21, 1
      %s27 = ssub.s32 %s21, 2
      %s28 = sadd.s32 %s21, 1
      %s29 = ssub.s32 %s21, %s28
      %p30 = scmp.eq.s32.totalorder %s29, 0
      %s32 = sadd.s32 %s31, 1
      %s33 = scalar_select %p30, %s31, %s32
      %p36 = pneg %p30
      %p37 = scmp.eq.s32.totalorder %s21, 1
      %p38 = por %p36, %p37
      %p39 = scmp.ne.s32.totalorder %s31, %s34
      %p40 = scmp.eq.s32.totalorder %s21, 0
      %p41 = por %p39, %p40
      %p42 = scmp.ne.s32.totalorder %s31, %s34
      %p43 = scmp.eq.s32.totalorder %s26, 1
      %p44 = por %p42, %p43
      %p45 = scmp.ne.s32.totalorder %s34, %s35
      %p46 = scmp.eq.s32.totalorder %s26, 0
      %p47 = por %p45, %p46
      %p48 = scmp.ne.s32.totalorder %s34, %s35
      %p49 = scmp.eq.s32.totalorder %s27, 1
      %p50 = por %p48, %p49
      %p52 = scmp.ne.s32.totalorder %s35, %s51
      %p53 = scmp.eq.s32.totalorder %s27, 0
      %p54 = por %p52, %p53
      %s56 = sadd.s32 %s55, 1
      %p59 = scmp.eq.s32.totalorder %s21, 1
      %p60 = scmp.ne.s32.totalorder %s55, %s57
      %p61 = scmp.eq.s32.totalorder %s21, 0
      %p62 = por %p60, %p61
      %p63 = scmp.ne.s32.totalorder %s55, %s57
      %p64 = scmp.eq.s32.totalorder %s26, 1
      %p65 = por %p63, %p64
      %p66 = scmp.ne.s32.totalorder %s57, %s58
      %p67 = scmp.eq.s32.totalorder %s26, 0
      %p68 = por %p66, %p67
      %p69 = scmp.ne.s32.totalorder %s57, %s58
      %p70 = scmp.eq.s32.totalorder %s27, 1
      %p71 = por %p69, %p70
      %p73 = scmp.ne.s32.totalorder %s58, %s72
      %p74 = scmp.eq.s32.totalorder %s27, 0
      %p75 = por %p73, %p74
      %s77 = sadd.s32 %s76, 1
      %p80 = scmp.eq.s32.totalorder %s21, 1
      %p81 = scmp.ne.s32.totalorder %s76, %s78
      %p82 = scmp.eq.s32.totalorder %s21, 0
      %p83 = por %p81, %p82
      %p84 = scmp.ne.s32.totalorder %s76, %s78
      %p85 = scmp.eq.s32.totalorder %s26, 1
      %p86 = por %p84, %p85
      %p87 = scmp.ne.s32.totalorder %s78, %s79
      %p88 = scmp.eq.s32.totalorder %s26, 0
      %p89 = por %p87, %p88
      %p90 = scmp.ne.s32.totalorder %s78, %s79
      %p91 = scmp.eq.s32.totalorder %s27, 1
      %p92 = por %p90, %p91
      %p94 = scmp.ne.s32.totalorder %s79, %s93
      %p95 = scmp.eq.s32.totalorder %s27, 0
      %p96 = por %p94, %p95
      %s98 = sadd.s32 %s97, 1
      %p101 = scmp.eq.s32.totalorder %s21, 1
      %p102 = scmp.ne.s32.totalorder %s97, %s99
      %p103 = scmp.eq.s32.totalorder %s21, 0
      %p104 = por %p102, %p103
      %p105 = scmp.ne.s32.totalorder %s97, %s99
      %p106 = scmp.eq.s32.totalorder %s26, 1
      %p107 = por %p105, %p106
      %p108 = scmp.ne.s32.totalorder %s99, %s100
      %p109 = scmp.eq.s32.totalorder %s26, 0
      %p110 = por %p108, %p109
      %p111 = scmp.ne.s32.totalorder %s99, %s100
      %p112 = scmp.eq.s32.totalorder %s27, 1
      %p113 = por %p111, %p112
      %p115 = scmp.ne.s32.totalorder %s100, %s114
      %p116 = scmp.eq.s32.totalorder %s27, 0
      %p117 = por %p115, %p116
      %s119 = sadd.s32 %s118, 1
      %p122 = scmp.eq.s32.totalorder %s21, 1
      %p123 = scmp.ne.s32.totalorder %s118, %s120
      %p124 = scmp.eq.s32.totalorder %s21, 0
      %p125 = por %p123, %p124
      %p126 = scmp.ne.s32.totalorder %s118, %s120
      %p127 = scmp.eq.s32.totalorder %s26, 1
      %p128 = por %p126, %p127
      %p129 = scmp.ne.s32.totalorder %s120, %s121
      %p130 = scmp.eq.s32.totalorder %s26, 0
      %p131 = por %p129, %p130
      %p132 = scmp.ne.s32.totalorder %s120, %s121
      %p133 = scmp.eq.s32.totalorder %s27, 1
      %p134 = por %p132, %p133
      %p136 = scmp.ne.s32.totalorder %s121, %s135
      %p137 = scmp.eq.s32.totalorder %s27, 0
      %p138 = por %p136, %p137
      %s140 = sadd.s32 %s139, 1
      %p143 = scmp.eq.s32.totalorder %s21, 1
      %p144 = scmp.ne.s32.totalorder %s139, %s141
      %p145 = scmp.eq.s32.totalorder %s21, 0
      %p146 = por %p144, %p145
      %p147 = scmp.ne.s32.totalorder %s139, %s141
      %p148 = scmp.eq.s32.totalorder %s26, 1
      %p149 = por %p147, %p148
      %p150 = scmp.ne.s32.totalorder %s141, %s142
      %p151 = scmp.eq.s32.totalorder %s26, 0
      %p152 = por %p150, %p151
      %p153 = scmp.ne.s32.totalorder %s141, %s142
      %p154 = scmp.eq.s32.totalorder %s27, 1
      %p155 = por %p153, %p154
      %p157 = scmp.ne.s32.totalorder %s142, %s156
      %p158 = scmp.eq.s32.totalorder %s27, 0
      %p159 = por %p157, %p158
      %s161 = sadd.s32 %s160, 1
      %p164 = scmp.eq.s32.totalorder %s21, 1
      %p165 = scmp.ne.s32.totalorder %s160, %s162
      %p166 = scmp.eq.s32.totalorder %s21, 0
      %p167 = por %p165, %p166
      %p168 = scmp.ne.s32.totalorder %s160, %s162
      %p169 = scmp.eq.s32.totalorder %s26, 1
      %p170 = por %p168, %p169
      %p171 = scmp.ne.s32.totalorder %s162, %s163
      %p172 = scmp.eq.s32.totalorder %s26, 0
      %p173 = por %p171, %p172
      %p174 = scmp.ne.s32.totalorder %s162, %s163
      %p175 = scmp.eq.s32.totalorder %s27, 1
      %p176 = por %p174, %p175
      %p178 = scmp.ne.s32.totalorder %s163, %s177
      %p179 = scmp.eq.s32.totalorder %s27, 0
      %p180 = por %p178, %p179
      %s181 = ssub.s32 %s21, %s28
      %p182 = scmp.eq.s32.totalorder %s181, 0
      %s184 = sadd.s32 %s183, 1
      %s185 = scalar_select %p182, %s183, %s184
      %p188 = pneg %p182
      %p189 = scmp.eq.s32.totalorder %s21, 1
      %p190 = por %p188, %p189
      %p191 = scmp.ne.s32.totalorder %s183, %s186
      %p192 = scmp.eq.s32.totalorder %s21, 0
      %p193 = por %p191, %p192
      %p194 = scmp.ne.s32.totalorder %s183, %s186
      %p195 = scmp.eq.s32.totalorder %s26, 1
      %p196 = por %p194, %p195
      %p197 = scmp.ne.s32.totalorder %s186, %s187
      %p198 = scmp.eq.s32.totalorder %s26, 0
      %p199 = por %p197, %p198
      %p200 = scmp.ne.s32.totalorder %s186, %s187
      %p201 = scmp.eq.s32.totalorder %s27, 1
      %p202 = por %p200, %p201
      %p204 = scmp.ne.s32.totalorder %s187, %s203
      %p205 = scmp.eq.s32.totalorder %s27, 0
      %p206 = por %p204, %p205
      %p207 = scmp.le.s32.totalorder 1, %s21
      %p208 = scmp.lt.s32.totalorder %s21, 3
      %p209 = pnand %p207, %p208
      %p210 = pneg %p209
      // Predicated region
      $region9: #{tpu_custom_call.1} parent=5 // pred_check
        _
      $region10: #{tpu_custom_call.1} parent=5 // pred_check_branch
        %212 = sbr.rel (%p209) target = $region12
      $region11: #{tpu_custom_call.1} parent=5 // pred_region
        %s213 = ssub.s32 %s21, 1
        // Predicated region
        $region13: #{tpu_custom_call.1} parent=11 // pred_check
          %p214 = pneg %p68
        $region14: #{tpu_custom_call.1} parent=11 // pred_check_branch
          %216 = sbr.rel (%p214) target = $region16
        $region15: #{tpu_custom_call.1} parent=11 // pred_region
          _
        $region16: #{tpu_custom_call.1} parent=11 // pred_fallthru
          _
        // Predicated region
        $region17: #{tpu_custom_call.1} parent=11 // pred_check
          %p217 = pneg %p89
        $region18: #{tpu_custom_call.1} parent=11 // pred_check_branch
          %219 = sbr.rel (%p217) target = $region20
        $region19: #{tpu_custom_call.1} parent=11 // pred_region
          _
        $region20: #{tpu_custom_call.1} parent=11 // pred_fallthru
          _
        // Predicated region
        $region21: #{tpu_custom_call.1} parent=11 // pred_check
          %p220 = pneg %p110
        $region22: #{tpu_custom_call.1} parent=11 // pred_check_branch
          %222 = sbr.rel (%p220) target = $region24
        $region23: #{tpu_custom_call.1} parent=11 // pred_region
          _
        $region24: #{tpu_custom_call.1} parent=11 // pred_fallthru
          _
        // Predicated region
        $region25: #{tpu_custom_call.1} parent=11 // pred_check
          %p223 = pneg %p131
        $region26: #{tpu_custom_call.1} parent=11 // pred_check_branch
          %225 = sbr.rel (%p223) target = $region28
        $region27: #{tpu_custom_call.1} parent=11 // pred_region
          _
        $region28: #{tpu_custom_call.1} parent=11 // pred_fallthru
          _
        // Predicated region
        $region29: #{tpu_custom_call.1} parent=11 // pred_check
          %p226 = pneg %p152
        $region30: #{tpu_custom_call.1} parent=11 // pred_check_branch
          %228 = sbr.rel (%p226) target = $region32
        $region31: #{tpu_custom_call.1} parent=11 // pred_region
          %s230 = ssub.s32 16384, 16384
          %231 = vsyncadd [#allocation7], %s230
          %s232 = sshll.u32 [#allocation6], 4
          %s233 = int_to_ptr.vmem [resolvable:$true] %s232
          %238 = dma.hbm_to_vmem [thread:$0]  %s5, 16384, %s233, [#allocation7], 256, 256, 16
        $region32: #{tpu_custom_call.1} parent=11 // pred_fallthru
          _
        // Predicated region
        $region33: #{tpu_custom_call.1} parent=11 // pred_check
          %p239 = pneg %p173
        $region34: #{tpu_custom_call.1} parent=11 // pred_check_branch
          %241 = sbr.rel (%p239) target = $region36
        $region35: #{tpu_custom_call.1} parent=11 // pred_region
          _
        $region36: #{tpu_custom_call.1} parent=11 // pred_fallthru
          _
      $region12: #{tpu_custom_call.1} parent=5 // pred_fallthru
        _
      %p242 = scmp.lt.s32.totalorder %s21, 2
      // Predicated region
      $region37: #{tpu_custom_call.1} parent=5 // pred_check
        %p243 = pneg %p242
      $region38: #{tpu_custom_call.1} parent=5 // pred_check_branch
        %245 = sbr.rel (%p243) target = $region40
      $region39: #{tpu_custom_call.1} parent=5 // pred_region
        // Predicated region
        $region41: #{tpu_custom_call.1} parent=39 // pred_check
          %p246 = pneg %p41
        $region42: #{tpu_custom_call.1} parent=39 // pred_check_branch
          %248 = sbr.rel (%p246) target = $region44
        $region43: #{tpu_custom_call.1} parent=39 // pred_region
          %s249 = sand.u32 %s31, 1
          %s250 = scalar_lea.sflag [#allocation4], %s249
          %s251 = sand.u32 %s31, 1
          %s252 = smul.addr %s251, 64
          %s253 = scalar_lea.vmem [#allocation3], %s252
          %s255 = ssub.s32 1024, 1024
          %256 = vsyncadd %s250, %s255
          %s257 = smul.addr %s21, 8
          %s258 = smul.addr %s257, 128
          %s259 = scalar_lea.hbm %s0, %s258
          %s260 = sshll.u32 %s253, 4
          %s261 = int_to_ptr.vmem [resolvable:$true] %s260
          %266 = dma.hbm_to_vmem [thread:$0]  %s259, 1024, %s261, %s250, 256, 256, 16
        $region44: #{tpu_custom_call.1} parent=39 // pred_fallthru
          _
      $region40: #{tpu_custom_call.1} parent=5 // pred_fallthru
        _
      %p267 = scmp.le.s32.totalorder 1, %s21
      %p268 = scmp.lt.s32.totalorder %s21, 3
      %p269 = pnand %p267, %p268
      %p270 = pneg %p269
      // Predicated region
      $region45: #{tpu_custom_call.1} parent=5 // pred_check
        _
      $region46: #{tpu_custom_call.1} parent=5 // pred_check_branch
        %272 = sbr.rel (%p269) target = $region48
      $region47: #{tpu_custom_call.1} parent=5 // pred_region
        %s273 = ssub.s32 %s21, 1
        %s274 = sand.u32 %s34, 1
        %s275 = scalar_lea.sflag [#allocation4], %s274
        %s276 = sand.u32 %s34, 1
        %s277 = smul.addr %s276, 64
        %s278 = scalar_lea.vmem [#allocation3], %s277
        // Predicated region
        $region49: #{tpu_custom_call.1} parent=47 // pred_check
          %p279 = pneg %p47
        $region50: #{tpu_custom_call.1} parent=47 // pred_check_branch
          %281 = sbr.rel (%p279) target = $region52
        $region51: #{tpu_custom_call.1} parent=47 // pred_region
          %282 = dma.done %s275, 1024
        $region52: #{tpu_custom_call.1} parent=47 // pred_fallthru
          _
        // Predicated region
        $region53: #{tpu_custom_call.1} parent=47 // pred_check
          %p283 = pneg %p152
        $region54: #{tpu_custom_call.1} parent=47 // pred_check_branch
          %285 = sbr.rel (%p283) target = $region56
        $region55: #{tpu_custom_call.1} parent=47 // pred_region
          %286 = dma.done [#allocation7], 16384
        $region56: #{tpu_custom_call.1} parent=47 // pred_fallthru
          _
        %s287 = sand.u32 %s34, 1
        %s288 = scalar_lea.sflag [#allocation4], %s287
        %s289 = sand.u32 %s34, 1
        %s290 = smul.addr %s289, 64
        %s291 = scalar_lea.vmem [#allocation3], %s290
        %p292 = pneg %p47
        %p293 = pneg %p44
        %p294 = pneg %p68
        %p295 = pneg %p65
        %p296 = pneg %p89
        %p297 = pneg %p86
        %p298 = pneg %p110
        %p299 = pneg %p107
        %p300 = pneg %p131
        %p301 = pneg %p128
        %p302 = pneg %p152
        %p303 = pneg %p149
        %p304 = pneg %p173
        %p305 = pneg %p170
        %p306 = pneg %p199
        %p307 = pneg %p196
        %s308 = sand.u32 %s186, 1
        %s309 = scalar_lea.sflag [#allocation5], %s308
        %s310 = sand.u32 %s186, 1
        %s311 = smul.addr %s310, 64
        %s312 = scalar_lea.vmem [#allocation8], %s311
        %v313 = vld [vmem:[%s278] sm:$0xff]
        %v314 = vld [vmem:[%s278 + $0x8] sm:$0xff]
        %v315 = vld [vmem:[%s278 + $0x10] sm:$0xff]
        %v316 = vld [vmem:[%s278 + $0x18] sm:$0xff]
        %v317 = vld [vmem:[%s278 + $0x20] sm:$0xff]
        %v318 = vld [vmem:[%s278 + $0x28] sm:$0xff]
        %v319 = vld [vmem:[%s278 + $0x30] sm:$0xff]
        %v320 = vld [vmem:[%s278 + $0x38] sm:$0xff]
        %v321 = vadd.f32 %v313, %v314
        %322 = vadd.xlane.f32.xlu0 %v321
        %v323 = vpop.xlane.xlu0 %322
        %v324 = vadd.f32 %v315, %v316
        %325 = vadd.xlane.f32.xlu0 %v324
        %v326 = vpop.xlane.xlu0 %325
        %v327 = vadd.f32 %v317, %v318
        %328 = vadd.xlane.f32.xlu0 %v327
        %v329 = vpop.xlane.xlu0 %328
        %v330 = vadd.f32 %v319, %v320
        %331 = vadd.xlane.f32.xlu0 %v330
        %v332 = vpop.xlane.xlu0 %331
        %v333 = vmul.f32 %v323, 0.00390625
        %v334 = vmul.f32 %v326, 0.00390625
        %v335 = vmul.f32 %v329, 0.00390625
        %v336 = vmul.f32 %v332, 0.00390625
        %v337 = vmax.f32 %v313, %v314
        %338 = vmax.xlane.f32.xlu0 %v337
        %v339 = vpop.xlane.xlu0 %338
        %v340 = vmax.f32 %v315, %v316
        %341 = vmax.xlane.f32.xlu0 %v340
        %v342 = vpop.xlane.xlu0 %341
        %v343 = vmax.f32 %v317, %v318
        %344 = vmax.xlane.f32.xlu0 %v343
        %v345 = vpop.xlane.xlu0 %344
        %v346 = vmax.f32 %v319, %v320
        %347 = vmax.xlane.f32.xlu0 %v346
        %v348 = vpop.xlane.xlu0 %347
        %v353 = vlaneseq
        %v354 = vand.u32 %v353, 127
        %v355 = vlaneseq
        %v356 = vshrl.u32 %v355, 7
        %v357 = vsub.s32 %v354, %v356
        %v358 = vrot.slane %v333, %v357
        %v359 = vadd.s32 %v354, 4294967288
        %v360 = vlaneseq
        %v361 = vshrl.u32 %v360, 7
        %v362 = vsub.s32 %v359, %v361
        %v363 = vrot.slane %v334, %v362
        %vm364 = vcmask 130112
        %v365 = vsel %vm364, %v363, %v358
        %v366 = vadd.s32 %v354, 4294967280
        %v367 = vlaneseq
        %v368 = vshrl.u32 %v367, 7
        %v369 = vsub.s32 %v366, %v368
        %v370 = vrot.slane %v335, %v369
        %vm371 = vcmask 195712
        %v372 = vsel %vm371, %v370, %v365
        %v373 = vadd.s32 %v354, 4294967272
        %v374 = vlaneseq
        %v375 = vshrl.u32 %v374, 7
        %v376 = vsub.s32 %v373, %v375
        %v377 = vrot.slane %v336, %v376
        %vm378 = vcmask 261312
        %v379 = vsel %vm378, %v377, %v372
        %v385 = vlaneseq
        %v386 = vshrl.u32 %v385, 7
        %v387 = vsub.s32 %v354, %v386
        %v388 = vrot.slane %v339, %v387
        %v389 = vlaneseq
        %v390 = vshrl.u32 %v389, 7
        %v391 = vsub.s32 %v359, %v390
        %v392 = vrot.slane %v342, %v391
        %v393 = vsel %vm364, %v392, %v388
        %v394 = vlaneseq
        %v395 = vshrl.u32 %v394, 7
        %v396 = vsub.s32 %v366, %v395
        %v397 = vrot.slane %v345, %v396
        %v398 = vsel %vm371, %v397, %v393
        %v399 = vlaneseq
        %v400 = vshrl.u32 %v399, 7
        %v401 = vsub.s32 %v373, %v400
        %v402 = vrot.slane %v348, %v401
        %v403 = vsel %vm378, %v402, %v398
        %vm405 = vcmask 1040384
        %v406 = vsel %vm405, %v379, %v403
        %v407 = vld [vmem:[%s1] sm:$0xff]
        %v408 = vld [vmem:[%s1 + $0x8] sm:$0xff]
        %v409 = vld [vmem:[%s1 + $0x10] sm:$0xff]
        %v410 = vld [vmem:[%s1 + $0x18] sm:$0xff]
        %v411 = vld [vmem:[%s2] sm:$0x1]
        %v413 = vlaneseq
        %v414 = vshrl.u32 %v413, 7
        %v415 = vsub.s32 0, %v414
        %v416 = vrot.slane %v411, %v415
        %vm418 = vcmask 261120
        %v420 = vsel %vm418, %v406, 0
        %422 = vmatprep.subr.mxu0 0.0
        %423 = vmatpush1.msra.mxu0 %v407
        %424 = vmatprep.subr.mxu0 0.0
        %425 = vmatpush1.msra.mxu0 %v408
        %426 = vmatprep.subr.mxu0 0.0
        %427 = vmatpush1.msra.mxu0 %v409
        %428 = vmatprep.subr.mxu0 0.0
        %429 = vmatpush1.msra.mxu0 %v410
        %430 = vmatprep.subr.mxu0 0.0
        %431 = vmatpush1.msra.mxu0 0.0
        %432 = vmatprep.subr.mxu0 0.0
        %433 = vmatpush1.msra.mxu0 0.0
        %434 = vmatprep.subr.mxu0 0.0
        %435 = vmatpush1.msra.mxu0 0.0
        %436 = vmatprep.subr.mxu0 0.0
        %437 = vmatpush1.msra.mxu0 0.0
        %438 = vmatprep.subr.mxu0 0.0
        %439 = vmatpush1.msra.mxu0 0.0
        %440 = vmatprep.subr.mxu0 0.0
        %441 = vmatpush1.msra.mxu0 0.0
        %442 = vmatprep.subr.mxu0 0.0
        %443 = vmatpush1.msra.mxu0 0.0
        %444 = vmatprep.subr.mxu0 0.0
        %445 = vmatpush1.msra.mxu0 0.0
        %446 = vmatprep.subr.mxu0 0.0
        %447 = vmatpush1.msra.mxu0 0.0
        %448 = vmatprep.subr.mxu0 0.0
        %449 = vmatpush1.msra.mxu0 0.0
        %450 = vmatprep.subr.mxu0 0.0
        %451 = vmatpush1.msra.mxu0 0.0
        %452 = vmatprep.subr.mxu0 0.0
        %453 = vmatpush1.msra.mxu0 0.0
        %454 = vmatprep.subr.mxu0 0.0
        %455 = vmatpush1.msra.mxu0 0.0
        %456 = vmatprep.subr.mxu0 0.0
        %457 = vmatpush1.msra.mxu0 0.0
        %458 = vmatprep.subr.mxu0 0.0
        %459 = vmatpush1.msra.mxu0 0.0
        %460 = vmatprep.subr.mxu0 0.0
        %461 = vmatpush1.msra.mxu0 0.0
        %462 = vmatprep.subr.mxu0 0.0
        %463 = vmatpush1.msra.mxu0 0.0
        %464 = vmatprep.subr.mxu0 0.0
        %465 = vmatpush1.msra.mxu0 0.0
        %466 = vmatprep.subr.mxu0 0.0
        %467 = vmatpush1.msra.mxu0 0.0
        %468 = vmatprep.subr.mxu0 0.0
        %469 = vmatpush1.msra.mxu0 0.0
        %470 = vmatprep.subr.mxu0 0.0
        %471 = vmatpush1.msra.mxu0 0.0
        %472 = vmatprep.subr.mxu0 0.0
        %473 = vmatpush1.msra.mxu0 0.0
        %474 = vmatprep.subr.mxu0 0.0
        %475 = vmatpush1.msra.mxu0 0.0
        %476 = vmatprep.subr.mxu0 0.0
        %477 = vmatpush1.msra.mxu0 0.0
        %478 = vmatprep.subr.mxu0 0.0
        %479 = vmatpush1.msra.mxu0 0.0
        %480 = vmatprep.subr.mxu0 0.0
        %481 = vmatpush1.msra.mxu0 0.0
        %482 = vmatprep.subr.mxu0 0.0
        %483 = vmatpush1.msra.mxu0 0.0
        %484 = vmatprep.subr.mxu0 0.0
        %485 = vmatpush1.msra.mxu0 0.0
        %486 = vmatprep.mubr.f32.mxu0 0.0
        %487 = vmatmul.mubr.f32.gmra.mrb[0].mxu0 %v420
        %v488 = vpop.f32.mrb[0].mxu0
        %v489 = vadd.f32 %v416, %v488
        %v490 = vpop.f32.mrb[0].mxu0
        %491 = vdwg.mxu0
        %v492 = vmax.f32 %v489, 0.0
        %v493 = vld [vmem:[%s3] sm:$0xff]
        %v494 = vld [vmem:[%s4] sm:$0x1]
        %v496 = vlaneseq
        %v497 = vshrl.u32 %v496, 7
        %v498 = vsub.s32 0, %v497
        %v499 = vrot.slane %v494, %v498
        %vm501 = vcmask 64512
        %v503 = vsel %vm501, %v492, 0
        %505 = vmatprep.subr.mxu0 0.0
        %506 = vmatpush1.msra.mxu0 %v493
        %507 = vmatprep.subr.mxu0 0.0
        %508 = vmatpush1.msra.mxu0 0.0
        %509 = vmatprep.subr.mxu0 0.0
        %510 = vmatpush1.msra.mxu0 0.0
        %511 = vmatprep.subr.mxu0 0.0
        %512 = vmatpush1.msra.mxu0 0.0
        %513 = vmatprep.subr.mxu0 0.0
        %514 = vmatpush1.msra.mxu0 0.0
        %515 = vmatprep.subr.mxu0 0.0
        %516 = vmatpush1.msra.mxu0 0.0
        %517 = vmatprep.subr.mxu0 0.0
        %518 = vmatpush1.msra.mxu0 0.0
        %519 = vmatprep.subr.mxu0 0.0
        %520 = vmatpush1.msra.mxu0 0.0
        %521 = vmatprep.subr.mxu0 0.0
        %522 = vmatpush1.msra.mxu0 0.0
        %523 = vmatprep.subr.mxu0 0.0
        %524 = vmatpush1.msra.mxu0 0.0
        %525 = vmatprep.subr.mxu0 0.0
        %526 = vmatpush1.msra.mxu0 0.0
        %527 = vmatprep.subr.mxu0 0.0
        %528 = vmatpush1.msra.mxu0 0.0
        %529 = vmatprep.subr.mxu0 0.0
        %530 = vmatpush1.msra.mxu0 0.0
        %531 = vmatprep.subr.mxu0 0.0
        %532 = vmatpush1.msra.mxu0 0.0
        %533 = vmatprep.subr.mxu0 0.0
        %534 = vmatpush1.msra.mxu0 0.0
        %535 = vmatprep.subr.mxu0 0.0
        %536 = vmatpush1.msra.mxu0 0.0
        %537 = vmatprep.subr.mxu0 0.0
        %538 = vmatpush1.msra.mxu0 0.0
        %539 = vmatprep.subr.mxu0 0.0
        %540 = vmatpush1.msra.mxu0 0.0
        %541 = vmatprep.subr.mxu0 0.0
        %542 = vmatpush1.msra.mxu0 0.0
        %543 = vmatprep.subr.mxu0 0.0
        %544 = vmatpush1.msra.mxu0 0.0
        %545 = vmatprep.subr.mxu0 0.0
        %546 = vmatpush1.msra.mxu0 0.0
        %547 = vmatprep.subr.mxu0 0.0
        %548 = vmatpush1.msra.mxu0 0.0
        %549 = vmatprep.subr.mxu0 0.0
        %550 = vmatpush1.msra.mxu0 0.0
        %551 = vmatprep.subr.mxu0 0.0
        %552 = vmatpush1.msra.mxu0 0.0
        %553 = vmatprep.subr.mxu0 0.0
        %554 = vmatpush1.msra.mxu0 0.0
        %555 = vmatprep.subr.mxu0 0.0
        %556 = vmatpush1.msra.mxu0 0.0
        %557 = vmatprep.subr.mxu0 0.0
        %558 = vmatpush1.msra.mxu0 0.0
        %559 = vmatprep.subr.mxu0 0.0
        %560 = vmatpush1.msra.mxu0 0.0
        %561 = vmatprep.subr.mxu0 0.0
        %562 = vmatpush1.msra.mxu0 0.0
        %563 = vmatprep.subr.mxu0 0.0
        %564 = vmatpush1.msra.mxu0 0.0
        %565 = vmatprep.subr.mxu0 0.0
        %566 = vmatpush1.msra.mxu0 0.0
        %567 = vmatprep.subr.mxu0 0.0
        %568 = vmatpush1.msra.mxu0 0.0
        %569 = vmatprep.mubr.f32.mxu0 0.0
        %570 = vmatmul.mubr.f32.gmra.mrb[0].mxu0 %v503
        %v571 = vpop.f32.mrb[0].mxu0
        %v572 = vadd.f32 %v499, %v571
        %v573 = vpop.f32.mrb[0].mxu0
        %574 = vdwg.mxu0
        %v576 = vrot.slane %v572, 1
        %v578 = vadd.f32 %v572, %v576
        %v579 = vxor.u32 %v578, 2147483648
        %v580 = vmul.f32 %v579, 1.442695
        %v581 = vpow.pop %v580
        %v582 = vadd.f32 %v581, 1.0
        %v583 = vrcp.pop %v582
        %v584 = vmul.f32 1.0, %v583
        %v585 = vlaneseq
        %v586 = vshrl.u32 %v585, 7
        %v587 = vsub.s32 0, %v586
        %v588 = vrot.slane %v584, %v587
        %590 = vbcast.lane.b32.xlu0 %v588, 256
        %v591 = vpop.permute.xlu0 %590
        %s593 = sor.u32 256, 8
        %594 = vbcast.lane.b32.xlu0 %v588, %s593
        %v595 = vpop.permute.xlu0 %594
        %s597 = sor.u32 256, 16
        %598 = vbcast.lane.b32.xlu0 %v588, %s597
        %v599 = vpop.permute.xlu0 %598
        %s601 = sor.u32 256, 24
        %602 = vbcast.lane.b32.xlu0 %v588, %s601
        %v603 = vpop.permute.xlu0 %602
        %v604 = vmul.f32 %v313, %v591
        %v605 = vmul.f32 %v314, %v591
        %v606 = vmul.f32 %v315, %v595
        %v607 = vmul.f32 %v316, %v595
        %v608 = vmul.f32 %v317, %v599
        %v609 = vmul.f32 %v318, %v599
        %v610 = vmul.f32 %v319, %v603
        %v611 = vmul.f32 %v320, %v603
        %v612 = vmax.f32 %v604, %v608
        %v613 = vmax.f32 %v606, %v610
        %v614 = vmax.f32 %v612, %v613
        %v615 = vrot.slane %v614, 4
        %v616 = vmax.f32 %v614, %v615
        %v617 = vrot.slane %v616, 2
        %v618 = vmax.f32 %v616, %v617
        %v619 = vrot.slane %v618, 1
        %v620 = vmax.f32 %v618, %v619
        %v621 = vmax.f32 %v605, %v609
        %v622 = vmax.f32 %v607, %v611
        %v623 = vmax.f32 %v621, %v622
        %v624 = vrot.slane %v623, 4
        %v625 = vmax.f32 %v623, %v624
        %v626 = vrot.slane %v625, 2
        %v627 = vmax.f32 %v625, %v626
        %v628 = vrot.slane %v627, 1
        %v629 = vmax.f32 %v627, %v628
        %v630 = vadd.f32 %v604, %v606
        %v631 = vadd.f32 %v630, %v608
        %v632 = vadd.f32 %v631, %v610
        %v633 = vrot.slane %v632, 4
        %v634 = vadd.f32 %v632, %v633
        %v635 = vrot.slane %v634, 2
        %v636 = vadd.f32 %v634, %v635
        %v637 = vrot.slane %v636, 1
        %v638 = vadd.f32 %v636, %v637
        %v639 = vadd.f32 %v605, %v607
        %v640 = vadd.f32 %v639, %v609
        %v641 = vadd.f32 %v640, %v611
        %v642 = vrot.slane %v641, 4
        %v643 = vadd.f32 %v641, %v642
        %v644 = vrot.slane %v643, 2
        %v645 = vadd.f32 %v643, %v644
        %v646 = vrot.slane %v645, 1
        %v647 = vadd.f32 %v645, %v646
        %v648 = vmul.f32 %v638, 0.03125
        %v649 = vmul.f32 %v647, 0.03125
        %v650 = vld [vmem:[#allocation6] sm:$0xff]
        %v651 = vld [vmem:[#allocation6 + $0x8] sm:$0xff]
        %v652 = vld [vmem:[#allocation6 + $0x10] sm:$0xff]
        %v653 = vld [vmem:[#allocation6 + $0x18] sm:$0xff]
        %v654 = vld [vmem:[#allocation6 + $0x20] sm:$0xff]
        %v655 = vld [vmem:[#allocation6 + $0x28] sm:$0xff]
        %v656 = vld [vmem:[#allocation6 + $0x30] sm:$0xff]
        %v657 = vld [vmem:[#allocation6 + $0x38] sm:$0xff]
        %v658 = vld [vmem:[#allocation6 + $0x40] sm:$0xff]
        %v659 = vld [vmem:[#allocation6 + $0x48] sm:$0xff]
        %v660 = vld [vmem:[#allocation6 + $0x50] sm:$0xff]
        %v661 = vld [vmem:[#allocation6 + $0x58] sm:$0xff]
        %v662 = vld [vmem:[#allocation6 + $0x60] sm:$0xff]
        %v663 = vld [vmem:[#allocation6 + $0x68] sm:$0xff]
        %v664 = vld [vmem:[#allocation6 + $0x70] sm:$0xff]
        %v665 = vld [vmem:[#allocation6 + $0x78] sm:$0xff]
        %v666 = vld [vmem:[#allocation6 + $0x80] sm:$0xff]
        %v667 = vld [vmem:[#allocation6 + $0x88] sm:$0xff]
        %v668 = vld [vmem:[#allocation6 + $0x90] sm:$0xff]
        %v669 = vld [vmem:[#allocation6 + $0x98] sm:$0xff]
        %v670 = vld [vmem:[#allocation6 + $0xa0] sm:$0xff]
        %v671 = vld [vmem:[#allocation6 + $0xa8] sm:$0xff]
        %v672 = vld [vmem:[#allocation6 + $0xb0] sm:$0xff]
        %v673 = vld [vmem:[#allocation6 + $0xb8] sm:$0xff]
        %v674 = vld [vmem:[#allocation6 + $0xc0] sm:$0xff]
        %v675 = vld [vmem:[#allocation6 + $0xc8] sm:$0xff]
        %v676 = vld [vmem:[#allocation6 + $0xd0] sm:$0xff]
        %v677 = vld [vmem:[#allocation6 + $0xd8] sm:$0xff]
        %v678 = vld [vmem:[#allocation6 + $0xe0] sm:$0xff]
        %v679 = vld [vmem:[#allocation6 + $0xe8] sm:$0xff]
        %v680 = vld [vmem:[#allocation6 + $0xf0] sm:$0xff]
        %v681 = vld [vmem:[#allocation6 + $0xf8] sm:$0xff]
        %v682 = vld [vmem:[#allocation6 + $0x100] sm:$0xff]
        %v683 = vld [vmem:[#allocation6 + $0x108] sm:$0xff]
        %v684 = vld [vmem:[#allocation6 + $0x110] sm:$0xff]
        %v685 = vld [vmem:[#allocation6 + $0x118] sm:$0xff]
        %v686 = vld [vmem:[#allocation6 + $0x120] sm:$0xff]
        %v687 = vld [vmem:[#allocation6 + $0x128] sm:$0xff]
        %v688 = vld [vmem:[#allocation6 + $0x130] sm:$0xff]
        %v689 = vld [vmem:[#allocation6 + $0x138] sm:$0xff]
        %v690 = vld [vmem:[#allocation6 + $0x140] sm:$0xff]
        %v691 = vld [vmem:[#allocation6 + $0x148] sm:$0xff]
        %v692 = vld [vmem:[#allocation6 + $0x150] sm:$0xff]
        %v693 = vld [vmem:[#allocation6 + $0x158] sm:$0xff]
        %v694 = vld [vmem:[#allocation6 + $0x160] sm:$0xff]
        %v695 = vld [vmem:[#allocation6 + $0x168] sm:$0xff]
        %v696 = vld [vmem:[#allocation6 + $0x170] sm:$0xff]
        %v697 = vld [vmem:[#allocation6 + $0x178] sm:$0xff]
        %v698 = vld [vmem:[#allocation6 + $0x180] sm:$0xff]
        %v699 = vld [vmem:[#allocation6 + $0x188] sm:$0xff]
        %v700 = vld [vmem:[#allocation6 + $0x190] sm:$0xff]
        %v701 = vld [vmem:[#allocation6 + $0x198] sm:$0xff]
        %v702 = vld [vmem:[#allocation6 + $0x1a0] sm:$0xff]
        %v703 = vld [vmem:[#allocation6 + $0x1a8] sm:$0xff]
        %v704 = vld [vmem:[#allocation6 + $0x1b0] sm:$0xff]
        %v705 = vld [vmem:[#allocation6 + $0x1b8] sm:$0xff]
        %v706 = vld [vmem:[#allocation6 + $0x1c0] sm:$0xff]
        %v707 = vld [vmem:[#allocation6 + $0x1c8] sm:$0xff]
        %v708 = vld [vmem:[#allocation6 + $0x1d0] sm:$0xff]
        %v709 = vld [vmem:[#allocation6 + $0x1d8] sm:$0xff]
        %v710 = vld [vmem:[#allocation6 + $0x1e0] sm:$0xff]
        %v711 = vld [vmem:[#allocation6 + $0x1e8] sm:$0xff]
        %v712 = vld [vmem:[#allocation6 + $0x1f0] sm:$0xff]
        %v713 = vld [vmem:[#allocation6 + $0x1f8] sm:$0xff]
        %v714 = vld [vmem:[#allocation6 + $0x200] sm:$0xff]
        %v715 = vld [vmem:[#allocation6 + $0x208] sm:$0xff]
        %v716 = vld [vmem:[#allocation6 + $0x210] sm:$0xff]
        %v717 = vld [vmem:[#allocation6 + $0x218] sm:$0xff]
        %v718 = vld [vmem:[#allocation6 + $0x220] sm:$0xff]
        %v719 = vld [vmem:[#allocation6 + $0x228] sm:$0xff]
        %v720 = vld [vmem:[#allocation6 + $0x230] sm:$0xff]
        %v721 = vld [vmem:[#allocation6 + $0x238] sm:$0xff]
        %v722 = vld [vmem:[#allocation6 + $0x240] sm:$0xff]
        %v723 = vld [vmem:[#allocation6 + $0x248] sm:$0xff]
        %v724 = vld [vmem:[#allocation6 + $0x250] sm:$0xff]
        %v725 = vld [vmem:[#allocation6 + $0x258] sm:$0xff]
        %v726 = vld [vmem:[#allocation6 + $0x260] sm:$0xff]
        %v727 = vld [vmem:[#allocation6 + $0x268] sm:$0xff]
        %v728 = vld [vmem:[#allocation6 + $0x270] sm:$0xff]
        %v729 = vld [vmem:[#allocation6 + $0x278] sm:$0xff]
        %v730 = vld [vmem:[#allocation6 + $0x280] sm:$0xff]
        %v731 = vld [vmem:[#allocation6 + $0x288] sm:$0xff]
        %v732 = vld [vmem:[#allocation6 + $0x290] sm:$0xff]
        %v733 = vld [vmem:[#allocation6 + $0x298] sm:$0xff]
        %v734 = vld [vmem:[#allocation6 + $0x2a0] sm:$0xff]
        %v735 = vld [vmem:[#allocation6 + $0x2a8] sm:$0xff]
        %v736 = vld [vmem:[#allocation6 + $0x2b0] sm:$0xff]
        %v737 = vld [vmem:[#allocation6 + $0x2b8] sm:$0xff]
        %v738 = vld [vmem:[#allocation6 + $0x2c0] sm:$0xff]
        %v739 = vld [vmem:[#allocation6 + $0x2c8] sm:$0xff]
        %v740 = vld [vmem:[#allocation6 + $0x2d0] sm:$0xff]
        %v741 = vld [vmem:[#allocation6 + $0x2d8] sm:$0xff]
        %v742 = vld [vmem:[#allocation6 + $0x2e0] sm:$0xff]
        %v743 = vld [vmem:[#allocation6 + $0x2e8] sm:$0xff]
        %v744 = vld [vmem:[#allocation6 + $0x2f0] sm:$0xff]
        %v745 = vld [vmem:[#allocation6 + $0x2f8] sm:$0xff]
        %v746 = vld [vmem:[#allocation6 + $0x300] sm:$0xff]
        %v747 = vld [vmem:[#allocation6 + $0x308] sm:$0xff]
        %v748 = vld [vmem:[#allocation6 + $0x310] sm:$0xff]
        %v749 = vld [vmem:[#allocation6 + $0x318] sm:$0xff]
        %v750 = vld [vmem:[#allocation6 + $0x320] sm:$0xff]
        %v751 = vld [vmem:[#allocation6 + $0x328] sm:$0xff]
        %v752 = vld [vmem:[#allocation6 + $0x330] sm:$0xff]
        %v753 = vld [vmem:[#allocation6 + $0x338] sm:$0xff]
        %v754 = vld [vmem:[#allocation6 + $0x340] sm:$0xff]
        %v755 = vld [vmem:[#allocation6 + $0x348] sm:$0xff]
        %v756 = vld [vmem:[#allocation6 + $0x350] sm:$0xff]
        %v757 = vld [vmem:[#allocation6 + $0x358] sm:$0xff]
        %v758 = vld [vmem:[#allocation6 + $0x360] sm:$0xff]
        %v759 = vld [vmem:[#allocation6 + $0x368] sm:$0xff]
        %v760 = vld [vmem:[#allocation6 + $0x370] sm:$0xff]
        %v761 = vld [vmem:[#allocation6 + $0x378] sm:$0xff]
        %v762 = vld [vmem:[#allocation6 + $0x380] sm:$0xff]
        %v763 = vld [vmem:[#allocation6 + $0x388] sm:$0xff]
        %v764 = vld [vmem:[#allocation6 + $0x390] sm:$0xff]
        %v765 = vld [vmem:[#allocation6 + $0x398] sm:$0xff]
        %v766 = vld [vmem:[#allocation6 + $0x3a0] sm:$0xff]
        %v767 = vld [vmem:[#allocation6 + $0x3a8] sm:$0xff]
        %v768 = vld [vmem:[#allocation6 + $0x3b0] sm:$0xff]
        %v769 = vld [vmem:[#allocation6 + $0x3b8] sm:$0xff]
        %v770 = vld [vmem:[#allocation6 + $0x3c0] sm:$0xff]
        %v771 = vld [vmem:[#allocation6 + $0x3c8] sm:$0xff]
        %v772 = vld [vmem:[#allocation6 + $0x3d0] sm:$0xff]
        %v773 = vld [vmem:[#allocation6 + $0x3d8] sm:$0xff]
        %v774 = vld [vmem:[#allocation6 + $0x3e0] sm:$0xff]
        %v775 = vld [vmem:[#allocation6 + $0x3e8] sm:$0xff]
        %v776 = vld [vmem:[#allocation6 + $0x3f0] sm:$0xff]
        %v777 = vld [vmem:[#allocation6 + $0x3f8] sm:$0xff]
        %s778 = sld [smem:[#allocation2]]
        %v779 = vstv %s778
        %780 = vmatprep.subr.mxu0 %v651
        %781 = vmatpush1.msra.mxu0 %v650
        %782 = vmatprep.subr.mxu0 %v653
        %783 = vmatpush1.msra.mxu0 %v652
        %784 = vmatprep.subr.mxu0 %v655
        %785 = vmatpush1.msra.mxu0 %v654
        %786 = vmatprep.subr.mxu0 %v657
        %787 = vmatpush1.msra.mxu0 %v656
        %788 = vmatprep.subr.mxu0 %v659
        %789 = vmatpush1.msra.mxu0 %v658
        %790 = vmatprep.subr.mxu0 %v661
        %791 = vmatpush1.msra.mxu0 %v660
        %792 = vmatprep.subr.mxu0 %v663
        %793 = vmatpush1.msra.mxu0 %v662
        %794 = vmatprep.subr.mxu0 %v665
        %795 = vmatpush1.msra.mxu0 %v664
        %796 = vmatprep.subr.mxu0 %v667
        %797 = vmatpush1.msra.mxu0 %v666
        %798 = vmatprep.subr.mxu0 %v669
        %799 = vmatpush1.msra.mxu0 %v668
        %800 = vmatprep.subr.mxu0 %v671
        %801 = vmatpush1.msra.mxu0 %v670
        %802 = vmatprep.subr.mxu0 %v673
        %803 = vmatpush1.msra.mxu0 %v672
        %804 = vmatprep.subr.mxu0 %v675
        %805 = vmatpush1.msra.mxu0 %v674
        %806 = vmatprep.subr.mxu0 %v677
        %807 = vmatpush1.msra.mxu0 %v676
        %808 = vmatprep.subr.mxu0 %v679
        %809 = vmatpush1.msra.mxu0 %v678
        %810 = vmatprep.subr.mxu0 %v681
        %811 = vmatpush1.msra.mxu0 %v680
        %812 = vmatprep.subr.mxu0 %v683
        %813 = vmatpush1.msra.mxu0 %v682
        %814 = vmatprep.subr.mxu0 %v685
        %815 = vmatpush1.msra.mxu0 %v684
        %816 = vmatprep.subr.mxu0 %v687
        %817 = vmatpush1.msra.mxu0 %v686
        %818 = vmatprep.subr.mxu0 %v689
        %819 = vmatpush1.msra.mxu0 %v688
        %820 = vmatprep.subr.mxu0 %v691
        %821 = vmatpush1.msra.mxu0 %v690
        %822 = vmatprep.subr.mxu0 %v693
        %823 = vmatpush1.msra.mxu0 %v692
        %824 = vmatprep.subr.mxu0 %v695
        %825 = vmatpush1.msra.mxu0 %v694
        %826 = vmatprep.subr.mxu0 %v697
        %827 = vmatpush1.msra.mxu0 %v696
        %828 = vmatprep.subr.mxu0 %v699
        %829 = vmatpush1.msra.mxu0 %v698
        %830 = vmatprep.subr.mxu0 %v701
        %831 = vmatpush1.msra.mxu0 %v700
        %832 = vmatprep.subr.mxu0 %v703
        %833 = vmatpush1.msra.mxu0 %v702
        %834 = vmatprep.subr.mxu0 %v705
        %835 = vmatpush1.msra.mxu0 %v704
        %836 = vmatprep.subr.mxu0 %v707
        %837 = vmatpush1.msra.mxu0 %v706
        %838 = vmatprep.subr.mxu0 %v709
        %839 = vmatpush1.msra.mxu0 %v708
        %840 = vmatprep.subr.mxu0 %v711
        %841 = vmatpush1.msra.mxu0 %v710
        %842 = vmatprep.subr.mxu0 %v713
        %843 = vmatpush1.msra.mxu0 %v712
        %844 = vmatprep.mubr.f32.mxu0 %v629
        %845 = vmatmul.mubr.f32.gmra.mrb[0].mxu0 %v620
        %v846 = vpop.f32.mrb[0].mxu0
        %v847 = vadd.f32 %v779, %v846
        %v848 = vpop.f32.mrb[0].mxu0
        %v849 = vadd.f32 %v779, %v848
        %850 = vdwg.mxu0
        %851 = vmatprep.subr.mxu0 %v715
        %852 = vmatpush1.msra.mxu0 %v714
        %853 = vmatprep.subr.mxu0 %v717
        %854 = vmatpush1.msra.mxu0 %v716
        %855 = vmatprep.subr.mxu0 %v719
        %856 = vmatpush1.msra.mxu0 %v718
        %857 = vmatprep.subr.mxu0 %v721
        %858 = vmatpush1.msra.mxu0 %v720
        %859 = vmatprep.subr.mxu0 %v723
        %860 = vmatpush1.msra.mxu0 %v722
        %861 = vmatprep.subr.mxu0 %v725
        %862 = vmatpush1.msra.mxu0 %v724
        %863 = vmatprep.subr.mxu0 %v727
        %864 = vmatpush1.msra.mxu0 %v726
        %865 = vmatprep.subr.mxu0 %v729
        %866 = vmatpush1.msra.mxu0 %v728
        %867 = vmatprep.subr.mxu0 %v731
        %868 = vmatpush1.msra.mxu0 %v730
        %869 = vmatprep.subr.mxu0 %v733
        %870 = vmatpush1.msra.mxu0 %v732
        %871 = vmatprep.subr.mxu0 %v735
        %872 = vmatpush1.msra.mxu0 %v734
        %873 = vmatprep.subr.mxu0 %v737
        %874 = vmatpush1.msra.mxu0 %v736
        %875 = vmatprep.subr.mxu0 %v739
        %876 = vmatpush1.msra.mxu0 %v738
        %877 = vmatprep.subr.mxu0 %v741
        %878 = vmatpush1.msra.mxu0 %v740
        %879 = vmatprep.subr.mxu0 %v743
        %880 = vmatpush1.msra.mxu0 %v742
        %881 = vmatprep.subr.mxu0 %v745
        %882 = vmatpush1.msra.mxu0 %v744
        %883 = vmatprep.subr.mxu0 %v747
        %884 = vmatpush1.msra.mxu0 %v746
        %885 = vmatprep.subr.mxu0 %v749
        %886 = vmatpush1.msra.mxu0 %v748
        %887 = vmatprep.subr.mxu0 %v751
        %888 = vmatpush1.msra.mxu0 %v750
        %889 = vmatprep.subr.mxu0 %v753
        %890 = vmatpush1.msra.mxu0 %v752
        %891 = vmatprep.subr.mxu0 %v755
        %892 = vmatpush1.msra.mxu0 %v754
        %893 = vmatprep.subr.mxu0 %v757
        %894 = vmatpush1.msra.mxu0 %v756
        %895 = vmatprep.subr.mxu0 %v759
        %896 = vmatpush1.msra.mxu0 %v758
        %897 = vmatprep.subr.mxu0 %v761
        %898 = vmatpush1.msra.mxu0 %v760
        %899 = vmatprep.subr.mxu0 %v763
        %900 = vmatpush1.msra.mxu0 %v762
        %901 = vmatprep.subr.mxu0 %v765
        %902 = vmatpush1.msra.mxu0 %v764
        %903 = vmatprep.subr.mxu0 %v767
        %904 = vmatpush1.msra.mxu0 %v766
        %905 = vmatprep.subr.mxu0 %v769
        %906 = vmatpush1.msra.mxu0 %v768
        %907 = vmatprep.subr.mxu0 %v771
        %908 = vmatpush1.msra.mxu0 %v770
        %909 = vmatprep.subr.mxu0 %v773
        %910 = vmatpush1.msra.mxu0 %v772
        %911 = vmatprep.subr.mxu0 %v775
        %912 = vmatpush1.msra.mxu0 %v774
        %913 = vmatprep.subr.mxu0 %v777
        %914 = vmatpush1.msra.mxu0 %v776
        %915 = vmatprep.mubr.f32.mxu0 %v649
        %916 = vmatmul.mubr.f32.gmra.mrb[0].mxu0 %v648
        %v917 = vpop.f32.mrb[0].mxu0
        %v918 = vadd.f32 %v847, %v917
        %v919 = vpop.f32.mrb[0].mxu0
        %v920 = vadd.f32 %v849, %v919
        %921 = vdwg.mxu0
        %v922 = vxor.u32 %v918, 2147483648
        %v923 = vxor.u32 %v920, 2147483648
        %v924 = vmul.f32 %v922, 1.442695
        %v925 = vpow.pop %v924
        %v926 = vmul.f32 %v923, 1.442695
        %v927 = vpow.pop %v926
        %v928 = vadd.f32 %v925, 1.0
        %v929 = vadd.f32 %v927, 1.0
        %v930 = vrcp.pop %v928
        %v931 = vmul.f32 1.0, %v930
        %v932 = vrcp.pop %v929
        %v933 = vmul.f32 1.0, %v932
        %v934 = vlaneseq
        %v935 = vshrl.u32 %v934, 7
        %v936 = vsub.s32 0, %v935
        %v937 = vrot.slane %v931, %v936
        %v938 = vlaneseq
        %v939 = vshrl.u32 %v938, 7
        %v940 = vsub.s32 0, %v939
        %v941 = vrot.slane %v933, %v940
        %v942 = vmul.f32 %v604, %v937
        %v943 = vmul.f32 %v605, %v941
        %v944 = vmul.f32 %v606, %v937
        %v945 = vmul.f32 %v607, %v941
        %v946 = vmul.f32 %v608, %v937
        %v947 = vmul.f32 %v609, %v941
        %v948 = vmul.f32 %v610, %v937
        %v949 = vmul.f32 %v611, %v941
        %950 = vst [vmem:[%s312] sm:$0xff] %v942
        %951 = vst [vmem:[%s312 + $0x8] sm:$0xff] %v943
        %952 = vst [vmem:[%s312 + $0x10] sm:$0xff] %v944
        %953 = vst [vmem:[%s312 + $0x18] sm:$0xff] %v945
        %954 = vst [vmem:[%s312 + $0x20] sm:$0xff] %v946
        %955 = vst [vmem:[%s312 + $0x28] sm:$0xff] %v947
        %956 = vst [vmem:[%s312 + $0x30] sm:$0xff] %v948
        %957 = vst [vmem:[%s312 + $0x38] sm:$0xff] %v949
        %s958 = sand.u32 %s186, 1
        %s959 = scalar_lea.sflag [#allocation5], %s958
        %s960 = sand.u32 %s186, 1
        %s961 = smul.addr %s960, 64
        %s962 = scalar_lea.vmem [#allocation8], %s961
        // Predicated region
        $region57: #{tpu_custom_call.1} parent=47 // pred_check
          %p963 = pneg %p196
        $region58: #{tpu_custom_call.1} parent=47 // pred_check_branch
          %965 = sbr.rel (%p963) target = $region60
        $region59: #{tpu_custom_call.1} parent=47 // pred_region
          %s967 = ssub.s32 1024, 1024
          %968 = vsyncadd %s959, %s967
          %s969 = smul.addr %s26, 8
          %s970 = smul.addr %s969, 128
          %s971 = scalar_lea.hbm %s7, %s970
          %s972 = sshll.u32 %s962, 4
          %s973 = int_to_ptr.vmem [resolvable:$true] %s972
          %978 = dma.vmem_to_hbm [thread:$0]  %s973, 1024, %s971, %s959, 256, 256, 16
        $region60: #{tpu_custom_call.1} parent=47 // pred_fallthru
          _
      $region48: #{tpu_custom_call.1} parent=5 // pred_fallthru
        _
      %p979 = scmp.le.s32.totalorder 2, %s21
      // Predicated region
      $region61: #{tpu_custom_call.1} parent=5 // pred_check
        %p980 = pneg %p979
      $region62: #{tpu_custom_call.1} parent=5 // pred_check_branch
        %982 = sbr.rel (%p980) target = $region64
      $region63: #{tpu_custom_call.1} parent=5 // pred_region
        %s983 = ssub.s32 %s21, 2
        // Predicated region
        $region65: #{tpu_custom_call.1} parent=63 // pred_check
          %p984 = pneg %p202
        $region66: #{tpu_custom_call.1} parent=63 // pred_check_branch
          %986 = sbr.rel (%p984) target = $region68
        $region67: #{tpu_custom_call.1} parent=63 // pred_region
          %s987 = sand.u32 %s187, 1
          %s988 = scalar_lea.sflag [#allocation5], %s987
          %s989 = sand.u32 %s187, 1
          %s990 = smul.addr %s989, 64
          %s991 = scalar_lea.vmem [#allocation8], %s990
          %992 = dma.done %s988, 1024
        $region68: #{tpu_custom_call.1} parent=63 // pred_fallthru
          _
      $region64: #{tpu_custom_call.1} parent=5 // pred_fallthru
        _
    $region6: #{tpu_custom_call.1} parent=1 // loop_footer
      %s25 = sadd.s32 1, %s21
    $region7: #{tpu_custom_call.1} parent=1 // loop_footer_branch
      %20 = sbr.rel target = $region3
    $region8: #{tpu_custom_call.1} parent=1 // loop_exit
      _
    %993 = vsyncpa [#allocation4], 1
    %s994 = scalar_lea.sflag [#allocation4], 1
    %995 = vsyncpa %s994, 1
    %996 = vsyncpa [#allocation7], 1
    %997 = vsyncpa [#allocation5], 1
    %s998 = scalar_lea.sflag [#allocation5], 1
    %999 = vsyncpa %s998, 1

</llo_original>
